<compile_context>
chip_gen: v6e
topology: v6e:2x2x1
jax: 0.10.0
libtpu: 0.0.40
codegen_flags: <defaults>
</compile_context>

<pallas_src>
import functools
import math

import jax
import jax.numpy as jnp
import numpy as np
from jax.experimental import pallas as pl
from jax.experimental.pallas import tpu as pltpu


def _unit_vt_tail_kernel(xt_ref, w1_ref, b1_ref, w2_ref, b2_ref, y_ref, *,
                         T, K, pad):
    """One grid step = NB batch elements of the tail, flattened to 2-D rows.

    xt_ref: (MB, D)        tail activations, MB = NB*T rows; the block starts
                           at a batch boundary, so row r is
                           (batch r // T, time r % T).
    w1_ref: (K*D, D_out)   k=9 conv weights, tap-major rows, f32
    b1_ref: (1, D_out)     f32
    w2_ref: (D, D_out)     1x1 conv weights, f32
    b2_ref: (1, D_out)     f32
    y_ref:  (MB, D_out)
    """
    MB, D = xt_ref.shape

    x = xt_ref[...].astype(jnp.float32)

    # Time index of every row within its batch element (block is batch
    # aligned, so this is just r mod T).  2-D iota as required on TPU.
    t_idx = jax.lax.broadcasted_iota(jnp.int32, (MB, 1), 0) % T

    # Register-resident im2col: tap k of the k=9 conv is the tail shifted by
    # (k - pad) rows, zeroed wherever the shift crosses a batch boundary or
    # falls into the conv's zero padding.  No VMEM scratch, no masked
    # lane-offset stores -- the K taps are concatenated along lanes and fed
    # straight to the MXU.
    taps = []
    for k in range(K):
        off = k - pad
        if off == 0:
            tap = x
        elif off > 0:
            s = min(off, MB)
            tap = jnp.concatenate(
                [x[s:, :], jnp.zeros((s, D), jnp.float32)], axis=0)
        else:
            s = min(-off, MB)
            tap = jnp.concatenate(
                [jnp.zeros((s, D), jnp.float32), x[:MB - s, :]], axis=0)
        if off != 0:
            valid = jnp.logical_and(t_idx + off >= 0, t_idx + off < T)
            tap = jnp.where(valid, tap, 0.0)
        taps.append(tap)
    a = jnp.concatenate(taps, axis=-1)                       # (MB, K*D)

    # conv1 as one (MB, K*D) @ (K*D, D_out) MXU GEMM, f32 accumulation.
    acc = jnp.dot(a, w1_ref[...], preferred_element_type=jnp.float32)
    acc = acc + b1_ref[...]

    # Exact (erf-based) GELU, matching torch.nn.GELU() default.
    h = 0.5 * acc * (1.0 + jax.lax.erf(acc * (1.0 / math.sqrt(2.0))))

    # 1x1 conv as a second GEMM + bias.
    y = jnp.dot(h, w2_ref[...], preferred_element_type=jnp.float32)
    y = y + b2_ref[...]

    y_ref[...] = y.astype(y_ref.dtype)


def _pick_block_batch(N, T, D, d_out, K, itemsize):
    """Number of batch elements folded into one grid step.

    Target >=512 GEMM rows per step (fills the 256-wide v6e/v7x MXU M twice
    and amortizes the ~0.35us per-step overhead).  If even the full batch
    cannot reach that, collapse to a single step: extra steps are pure
    overhead on single-TC v5e/v6e, and the v7x megacore split is only worth
    keeping when each core still gets >=512 rows.  NB is capped so the
    double-buffered in/out blocks plus the f32 register working set stay well
    inside v7x's 32 MiB scoped VMEM.
    """
    target_rows = 512
    budget = 20 * 1024 * 1024                       # bytes, v7x-safe
    per_b = (2 * T * D + 2 * T * d_out) * itemsize \
        + T * (K * D + 2 * d_out) * 4               # register working set
    max_nb = max(1, budget // per_b)

    # Candidates keep the block legal: either the whole batch (grid=(1,)) or a
    # row count divisible by 8 (second-minor BlockSpec constraint).
    cands = [d for d in range(1, N + 1)
             if N % d == 0 and (d == N or (d * T) % 8 == 0)]
    fitting = [d for d in cands if d <= max_nb]
    if not fitting:
        return N                                    # grid=(1,) is always legal
    for d in fitting:
        if d * T >= target_rows:
            return d
    return fitting[-1]


def unit_vt_forward(x, params, *, V, kernel_size=9):
    """JAX/Pallas equivalent of unit_vt.forward (stride=1)."""
    N, L, D = x.shape
    K = kernel_size
    pad = (K - 1) // 2
    T = L - (V + 1)
    assert T >= 1, "sequence must extend past V+1"

    # Weight relayout, done once outside the kernel:
    #   w1: PyTorch OIH (D_out, D_in, K) -> tap-major (K*D_in, D_out)
    #   w2: (D_out, D_in, 1)             -> (D_in, D_out)
    w1 = jnp.transpose(params["w1"], (2, 1, 0)).reshape(K * D, -1)
    w1 = w1.astype(jnp.float32)
    b1 = params["b1"].reshape(1, -1).astype(jnp.float32)
    w2 = jnp.transpose(params["w2"][:, :, 0], (1, 0)).astype(jnp.float32)
    b2 = params["b2"].reshape(1, -1).astype(jnp.float32)
    d_out = w2.shape[1]
    assert d_out == D, "write-back into x requires out_channels == D"

    # Only the tail rows ever touch the kernel; head rows go straight from x
    # to the output in the .at[].set below (never DMA'd by the kernel).
    xt = x[:, V + 1:, :].reshape(N * T, D)

    NB = _pick_block_batch(N, T, D, d_out, K, x.dtype.itemsize)
    MB = NB * T
    grid = (N // NB,)

    y = pl.pallas_call(
        functools.partial(_unit_vt_tail_kernel, T=T, K=K, pad=pad),
        out_shape=jax.ShapeDtypeStruct((N * T, d_out), x.dtype),
        grid_spec=pltpu.PrefetchScalarGridSpec(
            num_scalar_prefetch=0,
            grid=grid,
            in_specs=[
                pl.BlockSpec((MB, D), lambda m: (m, 0)),          # tail rows
                pl.BlockSpec((K * D, d_out), lambda m: (0, 0)),   # w1
                pl.BlockSpec((1, d_out), lambda m: (0, 0)),       # b1
                pl.BlockSpec((D, d_out), lambda m: (0, 0)),       # w2
                pl.BlockSpec((1, d_out), lambda m: (0, 0)),       # b2
            ],
            out_specs=pl.BlockSpec((MB, d_out), lambda m: (m, 0)),
        ),
        compiler_params=pltpu.CompilerParams(
            dimension_semantics=("parallel",),
            vmem_limit_bytes=32 * 1024 * 1024,
        ),
    )(xt, w1, b1, w2, b2)

    # Functional equivalent of the module's in-place x[:, V+1:, :] = y.
    # (If the caller donates x, XLA performs this update in place.)
    return x.at[:, V + 1:, :].set(y.reshape(N, T, d_out).astype(x.dtype))


def _reference_forward(x, params, *, V, kernel_size=9):
    """Pure-JAX (f32) reference mirroring the PyTorch module."""
    K = kernel_size
    pad = (K - 1) // 2
    x_t = x[:, V + 1:, :]                               # (N, T, D)
    x_ncw = jnp.transpose(x_t, (0, 2, 1))               # (N, C, T)
    y = jax.lax.conv_general_dilated(
        x_ncw, params["w1"], window_strides=(1,), padding=[(pad, pad)],
        dimension_numbers=("NCH", "OIH", "NCH"))
    y = y + params["b1"][None, :, None]
    y = jax.nn.gelu(y, approximate=False)
    y = jax.lax.conv_general_dilated(
        y, params["w2"], window_strides=(1,), padding=[(0, 0)],
        dimension_numbers=("NCH", "OIH", "NCH"))
    y = y + params["b2"][None, :, None]
    y = jnp.transpose(y, (0, 2, 1))                     # (N, T, D)
    return x.at[:, V + 1:, :].set(y)


if __name__ == "__main__":
    # Small shapes consistent with the forward: in_channels == out_channels == D.
    N = 2
    D = 32          # in_channels = out_channels
    V = 5
    T = 16
    L = V + 1 + T   # 22
    K = 9

    key = jax.random.PRNGKey(0)
    kx, k1, k2, k3, k4 = jax.random.split(key, 5)

    x = jax.random.normal(kx, (N, L, D), dtype=jnp.float32)
    params = {
        "w1": 0.1 * jax.random.normal(k1, (D, D, K), dtype=jnp.float32),  # Conv1d(D, D, 9)
        "b1": 0.1 * jax.random.normal(k2, (D,), dtype=jnp.float32),
        "w2": 0.1 * jax.random.normal(k3, (D, D, 1), dtype=jnp.float32),  # Conv1d(D, D, 1)
        "b2": 0.1 * jax.random.normal(k4, (D,), dtype=jnp.float32),
    }

    fwd = jax.jit(functools.partial(unit_vt_forward, V=V, kernel_size=K))
    out = jax.block_until_ready(fwd(x, params))

    ref = jax.block_until_ready(_reference_forward(x, params, V=V, kernel_size=K))
    # f32 operands with f32 accumulation; tolerance covers the MXU's internal
    # bf16-pass rounding under default matmul precision.
    np.testing.assert_allclose(np.asarray(out), np.asarray(ref),
                               rtol=2e-2, atol=2e-2)

    print("KERNEL_OK")
</pallas_src>

<mosaic_0001>
module attributes {stable_mosaic.version = 11 : i64} {
  func.func @_unit_vt_tail_kernel(%arg0: i32, %arg1: memref<32x32xf32, #tpu.memory_space<vmem>>, %arg2: memref<288x32xf32, #tpu.memory_space<vmem>>, %arg3: memref<1x32xf32, #tpu.memory_space<vmem>>, %arg4: memref<32x32xf32, #tpu.memory_space<vmem>>, %arg5: memref<1x32xf32, #tpu.memory_space<vmem>>, %arg6: memref<32x32xf32, #tpu.memory_space<vmem>>) attributes {dimension_semantics = [#tpu.dimension_semantics<parallel>], iteration_bounds = array<i64: 1>, scalar_prefetch = 0 : i64, scratch_operands = 0 : i64, tpu.core_type = #tpu.core_type<tc>, window_params = [{transform_indices = @transform_0, window_bounds = array<i64: 32, 32>}, {pipeline_mode = #tpu.pipeline_mode<synchronous>, transform_indices = @transform_1, window_bounds = array<i64: 288, 32>}, {pipeline_mode = #tpu.pipeline_mode<synchronous>, transform_indices = @transform_2, window_bounds = array<i64: 1, 32>}, {pipeline_mode = #tpu.pipeline_mode<synchronous>, transform_indices = @transform_3, window_bounds = array<i64: 32, 32>}, {pipeline_mode = #tpu.pipeline_mode<synchronous>, transform_indices = @transform_4, window_bounds = array<i64: 1, 32>}, {transform_indices = @transform_5, window_bounds = array<i64: 32, 32>}]} {
    %c0 = arith.constant 0 : index
    %c0_0 = arith.constant 0 : index
    %0 = vector.load %arg1[%c0, %c0_0] : memref<32x32xf32, #tpu.memory_space<vmem>>, vector<32x32xf32>
    %1 = tpu.iota {dimensions = array<i32: 0>} : vector<32x1xi32>
    %c16_i32 = arith.constant 16 : i32
    %c0_i32 = arith.constant 0 : i32
    %2 = arith.cmpi eq, %c16_i32, %c0_i32 : i32
    %c1_i32 = arith.constant 1 : i32
    %3 = arith.select %2, %c1_i32, %c16_i32 : i32
    %4 = vector.broadcast %3 : i32 to vector<32x1xi32>
    %5 = arith.remsi %1, %4 : vector<32x1xi32>
    %c0_i32_1 = arith.constant 0 : i32
    %6 = vector.broadcast %c0_i32_1 : i32 to vector<32x1xi32>
    %7 = arith.cmpi ne, %5, %6 : vector<32x1xi32>
    %c0_i32_2 = arith.constant 0 : i32
    %8 = vector.broadcast %c0_i32_2 : i32 to vector<32x1xi32>
    %9 = arith.cmpi slt, %5, %8 : vector<32x1xi32>
    %c0_i32_3 = arith.constant 0 : i32
    %10 = arith.cmpi slt, %3, %c0_i32_3 : i32
    %11 = vector.broadcast %10 : i1 to vector<32x1xi1>
    %12 = vector.broadcast %11 : vector<32x1xi1> to vector<32x1xi1>
    %13 = arith.xori %9, %12 : vector<32x1xi1>
    %14 = arith.andi %13, %7 : vector<32x1xi1>
    %15 = vector.broadcast %3 : i32 to vector<32x1xi32>
    %16 = arith.addi %5, %15 : vector<32x1xi32>
    %17 = arith.select %14, %16, %5 : vector<32x1xi1>, vector<32x1xi32>
    %cst = arith.constant 0.000000e+00 : f32
    %18 = vector.broadcast %cst : f32 to vector<4x32xf32>
    %19 = vector.extract_strided_slice %0 {offsets = [0, 0], sizes = [28, 32], strides = [1, 1]} : vector<32x32xf32> to vector<28x32xf32>
    %20 = tpu.concatenate %18, %19 in 0 : vector<4x32xf32>, vector<28x32xf32> -> vector<32x32xf32>
    %c-4_i32 = arith.constant -4 : i32
    %21 = vector.broadcast %c-4_i32 : i32 to vector<32x1xi32>
    %22 = arith.addi %17, %21 : vector<32x1xi32>
    %c0_i32_4 = arith.constant 0 : i32
    %23 = vector.broadcast %c0_i32_4 : i32 to vector<32x1xi32>
    %24 = arith.cmpi sge, %22, %23 : vector<32x1xi32>
    %c-4_i32_5 = arith.constant -4 : i32
    %25 = vector.broadcast %c-4_i32_5 : i32 to vector<32x1xi32>
    %26 = arith.addi %17, %25 : vector<32x1xi32>
    %c16_i32_6 = arith.constant 16 : i32
    %27 = vector.broadcast %c16_i32_6 : i32 to vector<32x1xi32>
    %28 = arith.cmpi slt, %26, %27 : vector<32x1xi32>
    %29 = arith.andi %24, %28 : vector<32x1xi1>
    %cst_7 = arith.constant 0.000000e+00 : f32
    %30 = vector.shape_cast %29 : vector<32x1xi1> to vector<32x1xi1>
    %31 = vector.broadcast %30 : vector<32x1xi1> to vector<32x32xi1>
    %32 = vector.broadcast %cst_7 : f32 to vector<32x32xf32>
    %33 = arith.select %31, %20, %32 : vector<32x32xi1>, vector<32x32xf32>
    %cst_8 = arith.constant 0.000000e+00 : f32
    %34 = vector.broadcast %cst_8 : f32 to vector<3x32xf32>
    %35 = vector.extract_strided_slice %0 {offsets = [0, 0], sizes = [29, 32], strides = [1, 1]} : vector<32x32xf32> to vector<29x32xf32>
    %36 = tpu.concatenate %34, %35 in 0 : vector<3x32xf32>, vector<29x32xf32> -> vector<32x32xf32>
    %c-3_i32 = arith.constant -3 : i32
    %37 = vector.broadcast %c-3_i32 : i32 to vector<32x1xi32>
    %38 = arith.addi %17, %37 : vector<32x1xi32>
    %c0_i32_9 = arith.constant 0 : i32
    %39 = vector.broadcast %c0_i32_9 : i32 to vector<32x1xi32>
    %40 = arith.cmpi sge, %38, %39 : vector<32x1xi32>
    %c-3_i32_10 = arith.constant -3 : i32
    %41 = vector.broadcast %c-3_i32_10 : i32 to vector<32x1xi32>
    %42 = arith.addi %17, %41 : vector<32x1xi32>
    %c16_i32_11 = arith.constant 16 : i32
    %43 = vector.broadcast %c16_i32_11 : i32 to vector<32x1xi32>
    %44 = arith.cmpi slt, %42, %43 : vector<32x1xi32>
    %45 = arith.andi %40, %44 : vector<32x1xi1>
    %cst_12 = arith.constant 0.000000e+00 : f32
    %46 = vector.shape_cast %45 : vector<32x1xi1> to vector<32x1xi1>
    %47 = vector.broadcast %46 : vector<32x1xi1> to vector<32x32xi1>
    %48 = vector.broadcast %cst_12 : f32 to vector<32x32xf32>
    %49 = arith.select %47, %36, %48 : vector<32x32xi1>, vector<32x32xf32>
    %cst_13 = arith.constant 0.000000e+00 : f32
    %50 = vector.broadcast %cst_13 : f32 to vector<2x32xf32>
    %51 = vector.extract_strided_slice %0 {offsets = [0, 0], sizes = [30, 32], strides = [1, 1]} : vector<32x32xf32> to vector<30x32xf32>
    %52 = tpu.concatenate %50, %51 in 0 : vector<2x32xf32>, vector<30x32xf32> -> vector<32x32xf32>
    %c-2_i32 = arith.constant -2 : i32
    %53 = vector.broadcast %c-2_i32 : i32 to vector<32x1xi32>
    %54 = arith.addi %17, %53 : vector<32x1xi32>
    %c0_i32_14 = arith.constant 0 : i32
    %55 = vector.broadcast %c0_i32_14 : i32 to vector<32x1xi32>
    %56 = arith.cmpi sge, %54, %55 : vector<32x1xi32>
    %c-2_i32_15 = arith.constant -2 : i32
    %57 = vector.broadcast %c-2_i32_15 : i32 to vector<32x1xi32>
    %58 = arith.addi %17, %57 : vector<32x1xi32>
    %c16_i32_16 = arith.constant 16 : i32
    %59 = vector.broadcast %c16_i32_16 : i32 to vector<32x1xi32>
    %60 = arith.cmpi slt, %58, %59 : vector<32x1xi32>
    %61 = arith.andi %56, %60 : vector<32x1xi1>
    %cst_17 = arith.constant 0.000000e+00 : f32
    %62 = vector.shape_cast %61 : vector<32x1xi1> to vector<32x1xi1>
    %63 = vector.broadcast %62 : vector<32x1xi1> to vector<32x32xi1>
    %64 = vector.broadcast %cst_17 : f32 to vector<32x32xf32>
    %65 = arith.select %63, %52, %64 : vector<32x32xi1>, vector<32x32xf32>
    %cst_18 = arith.constant 0.000000e+00 : f32
    %66 = vector.broadcast %cst_18 : f32 to vector<1x32xf32>
    %67 = vector.extract_strided_slice %0 {offsets = [0, 0], sizes = [31, 32], strides = [1, 1]} : vector<32x32xf32> to vector<31x32xf32>
    %68 = tpu.concatenate %66, %67 in 0 : vector<1x32xf32>, vector<31x32xf32> -> vector<32x32xf32>
    %c-1_i32 = arith.constant -1 : i32
    %69 = vector.broadcast %c-1_i32 : i32 to vector<32x1xi32>
    %70 = arith.addi %17, %69 : vector<32x1xi32>
    %c0_i32_19 = arith.constant 0 : i32
    %71 = vector.broadcast %c0_i32_19 : i32 to vector<32x1xi32>
    %72 = arith.cmpi sge, %70, %71 : vector<32x1xi32>
    %c-1_i32_20 = arith.constant -1 : i32
    %73 = vector.broadcast %c-1_i32_20 : i32 to vector<32x1xi32>
    %74 = arith.addi %17, %73 : vector<32x1xi32>
    %c16_i32_21 = arith.constant 16 : i32
    %75 = vector.broadcast %c16_i32_21 : i32 to vector<32x1xi32>
    %76 = arith.cmpi slt, %74, %75 : vector<32x1xi32>
    %77 = arith.andi %72, %76 : vector<32x1xi1>
    %cst_22 = arith.constant 0.000000e+00 : f32
    %78 = vector.shape_cast %77 : vector<32x1xi1> to vector<32x1xi1>
    %79 = vector.broadcast %78 : vector<32x1xi1> to vector<32x32xi1>
    %80 = vector.broadcast %cst_22 : f32 to vector<32x32xf32>
    %81 = arith.select %79, %68, %80 : vector<32x32xi1>, vector<32x32xf32>
    %82 = vector.extract_strided_slice %0 {offsets = [1, 0], sizes = [31, 32], strides = [1, 1]} : vector<32x32xf32> to vector<31x32xf32>
    %cst_23 = arith.constant 0.000000e+00 : f32
    %83 = vector.broadcast %cst_23 : f32 to vector<1x32xf32>
    %84 = tpu.concatenate %82, %83 in 0 : vector<31x32xf32>, vector<1x32xf32> -> vector<32x32xf32>
    %c1_i32_24 = arith.constant 1 : i32
    %85 = vector.broadcast %c1_i32_24 : i32 to vector<32x1xi32>
    %86 = arith.addi %17, %85 : vector<32x1xi32>
    %c0_i32_25 = arith.constant 0 : i32
    %87 = vector.broadcast %c0_i32_25 : i32 to vector<32x1xi32>
    %88 = arith.cmpi sge, %86, %87 : vector<32x1xi32>
    %c1_i32_26 = arith.constant 1 : i32
    %89 = vector.broadcast %c1_i32_26 : i32 to vector<32x1xi32>
    %90 = arith.addi %17, %89 : vector<32x1xi32>
    %c16_i32_27 = arith.constant 16 : i32
    %91 = vector.broadcast %c16_i32_27 : i32 to vector<32x1xi32>
    %92 = arith.cmpi slt, %90, %91 : vector<32x1xi32>
    %93 = arith.andi %88, %92 : vector<32x1xi1>
    %cst_28 = arith.constant 0.000000e+00 : f32
    %94 = vector.shape_cast %93 : vector<32x1xi1> to vector<32x1xi1>
    %95 = vector.broadcast %94 : vector<32x1xi1> to vector<32x32xi1>
    %96 = vector.broadcast %cst_28 : f32 to vector<32x32xf32>
    %97 = arith.select %95, %84, %96 : vector<32x32xi1>, vector<32x32xf32>
    %98 = vector.extract_strided_slice %0 {offsets = [2, 0], sizes = [30, 32], strides = [1, 1]} : vector<32x32xf32> to vector<30x32xf32>
    %cst_29 = arith.constant 0.000000e+00 : f32
    %99 = vector.broadcast %cst_29 : f32 to vector<2x32xf32>
    %100 = tpu.concatenate %98, %99 in 0 : vector<30x32xf32>, vector<2x32xf32> -> vector<32x32xf32>
    %c2_i32 = arith.constant 2 : i32
    %101 = vector.broadcast %c2_i32 : i32 to vector<32x1xi32>
    %102 = arith.addi %17, %101 : vector<32x1xi32>
    %c0_i32_30 = arith.constant 0 : i32
    %103 = vector.broadcast %c0_i32_30 : i32 to vector<32x1xi32>
    %104 = arith.cmpi sge, %102, %103 : vector<32x1xi32>
    %c2_i32_31 = arith.constant 2 : i32
    %105 = vector.broadcast %c2_i32_31 : i32 to vector<32x1xi32>
    %106 = arith.addi %17, %105 : vector<32x1xi32>
    %c16_i32_32 = arith.constant 16 : i32
    %107 = vector.broadcast %c16_i32_32 : i32 to vector<32x1xi32>
    %108 = arith.cmpi slt, %106, %107 : vector<32x1xi32>
    %109 = arith.andi %104, %108 : vector<32x1xi1>
    %cst_33 = arith.constant 0.000000e+00 : f32
    %110 = vector.shape_cast %109 : vector<32x1xi1> to vector<32x1xi1>
    %111 = vector.broadcast %110 : vector<32x1xi1> to vector<32x32xi1>
    %112 = vector.broadcast %cst_33 : f32 to vector<32x32xf32>
    %113 = arith.select %111, %100, %112 : vector<32x32xi1>, vector<32x32xf32>
    %114 = vector.extract_strided_slice %0 {offsets = [3, 0], sizes = [29, 32], strides = [1, 1]} : vector<32x32xf32> to vector<29x32xf32>
    %cst_34 = arith.constant 0.000000e+00 : f32
    %115 = vector.broadcast %cst_34 : f32 to vector<3x32xf32>
    %116 = tpu.concatenate %114, %115 in 0 : vector<29x32xf32>, vector<3x32xf32> -> vector<32x32xf32>
    %c3_i32 = arith.constant 3 : i32
    %117 = vector.broadcast %c3_i32 : i32 to vector<32x1xi32>
    %118 = arith.addi %17, %117 : vector<32x1xi32>
    %c0_i32_35 = arith.constant 0 : i32
    %119 = vector.broadcast %c0_i32_35 : i32 to vector<32x1xi32>
    %120 = arith.cmpi sge, %118, %119 : vector<32x1xi32>
    %c3_i32_36 = arith.constant 3 : i32
    %121 = vector.broadcast %c3_i32_36 : i32 to vector<32x1xi32>
    %122 = arith.addi %17, %121 : vector<32x1xi32>
    %c16_i32_37 = arith.constant 16 : i32
    %123 = vector.broadcast %c16_i32_37 : i32 to vector<32x1xi32>
    %124 = arith.cmpi slt, %122, %123 : vector<32x1xi32>
    %125 = arith.andi %120, %124 : vector<32x1xi1>
    %cst_38 = arith.constant 0.000000e+00 : f32
    %126 = vector.shape_cast %125 : vector<32x1xi1> to vector<32x1xi1>
    %127 = vector.broadcast %126 : vector<32x1xi1> to vector<32x32xi1>
    %128 = vector.broadcast %cst_38 : f32 to vector<32x32xf32>
    %129 = arith.select %127, %116, %128 : vector<32x32xi1>, vector<32x32xf32>
    %130 = vector.extract_strided_slice %0 {offsets = [4, 0], sizes = [28, 32], strides = [1, 1]} : vector<32x32xf32> to vector<28x32xf32>
    %cst_39 = arith.constant 0.000000e+00 : f32
    %131 = vector.broadcast %cst_39 : f32 to vector<4x32xf32>
    %132 = tpu.concatenate %130, %131 in 0 : vector<28x32xf32>, vector<4x32xf32> -> vector<32x32xf32>
    %c4_i32 = arith.constant 4 : i32
    %133 = vector.broadcast %c4_i32 : i32 to vector<32x1xi32>
    %134 = arith.addi %17, %133 : vector<32x1xi32>
    %c0_i32_40 = arith.constant 0 : i32
    %135 = vector.broadcast %c0_i32_40 : i32 to vector<32x1xi32>
    %136 = arith.cmpi sge, %134, %135 : vector<32x1xi32>
    %c4_i32_41 = arith.constant 4 : i32
    %137 = vector.broadcast %c4_i32_41 : i32 to vector<32x1xi32>
    %138 = arith.addi %17, %137 : vector<32x1xi32>
    %c16_i32_42 = arith.constant 16 : i32
    %139 = vector.broadcast %c16_i32_42 : i32 to vector<32x1xi32>
    %140 = arith.cmpi slt, %138, %139 : vector<32x1xi32>
    %141 = arith.andi %136, %140 : vector<32x1xi1>
    %cst_43 = arith.constant 0.000000e+00 : f32
    %142 = vector.shape_cast %141 : vector<32x1xi1> to vector<32x1xi1>
    %143 = vector.broadcast %142 : vector<32x1xi1> to vector<32x32xi1>
    %144 = vector.broadcast %cst_43 : f32 to vector<32x32xf32>
    %145 = arith.select %143, %132, %144 : vector<32x32xi1>, vector<32x32xf32>
    %146 = tpu.concatenate %33, %49, %65, %81, %0, %97, %113, %129, %145 in 1 : vector<32x32xf32>, vector<32x32xf32>, vector<32x32xf32>, vector<32x32xf32>, vector<32x32xf32>, vector<32x32xf32>, vector<32x32xf32>, vector<32x32xf32>, vector<32x32xf32> -> vector<32x288xf32>
    %c0_44 = arith.constant 0 : index
    %c0_45 = arith.constant 0 : index
    %147 = vector.load %arg2[%c0_44, %c0_45] : memref<288x32xf32, #tpu.memory_space<vmem>>, vector<288x32xf32>
    %cst_46 = arith.constant dense<0.000000e+00> : vector<32x32xf32>
    %148 = tpu.matmul %146, %147, %cst_46 {dimension_numbers = #tpu.dot_dimension_numbers<[1], [0], [0], [1], [0, 0, 1, 1], [], []>} : vector<32x288xf32>, vector<288x32xf32>, vector<32x32xf32> -> vector<32x32xf32>
    %c0_47 = arith.constant 0 : index
    %c0_48 = arith.constant 0 : index
    %149 = vector.load %arg3[%c0_47, %c0_48] : memref<1x32xf32, #tpu.memory_space<vmem>>, vector<1x32xf32>
    %150 = vector.broadcast %149 : vector<1x32xf32> to vector<32x32xf32>
    %151 = arith.addf %148, %150 : vector<32x32xf32>
    %cst_49 = arith.constant 5.000000e-01 : f32
    %152 = vector.broadcast %cst_49 : f32 to vector<32x32xf32>
    %153 = arith.mulf %152, %151 : vector<32x32xf32>
    %cst_50 = arith.constant 0.707106769 : f32
    %154 = vector.broadcast %cst_50 : f32 to vector<32x32xf32>
    %155 = arith.mulf %151, %154 : vector<32x32xf32>
    %156 = math.erf %155 : vector<32x32xf32>
    %cst_51 = arith.constant 1.000000e+00 : f32
    %157 = vector.broadcast %cst_51 : f32 to vector<32x32xf32>
    %158 = arith.addf %157, %156 : vector<32x32xf32>
    %159 = arith.mulf %153, %158 : vector<32x32xf32>
    %c0_52 = arith.constant 0 : index
    %c0_53 = arith.constant 0 : index
    %160 = vector.load %arg4[%c0_52, %c0_53] : memref<32x32xf32, #tpu.memory_space<vmem>>, vector<32x32xf32>
    %cst_54 = arith.constant dense<0.000000e+00> : vector<32x32xf32>
    %161 = tpu.matmul %159, %160, %cst_54 {dimension_numbers = #tpu.dot_dimension_numbers<[1], [0], [0], [1], [0, 0, 1, 1], [], []>} : vector<32x32xf32>, vector<32x32xf32>, vector<32x32xf32> -> vector<32x32xf32>
    %c0_55 = arith.constant 0 : index
    %c0_56 = arith.constant 0 : index
    %162 = vector.load %arg5[%c0_55, %c0_56] : memref<1x32xf32, #tpu.memory_space<vmem>>, vector<1x32xf32>
    %163 = vector.broadcast %162 : vector<1x32xf32> to vector<32x32xf32>
    %164 = arith.addf %161, %163 : vector<32x32xf32>
    %c0_57 = arith.constant 0 : index
    %c0_58 = arith.constant 0 : index
    %165 = vector.load %arg6[%c0_57, %c0_58] : memref<32x32xf32, #tpu.memory_space<vmem>>, vector<32x32xf32>
    tpu.vector_store %arg6[%c0_57, %c0_58], %164 {strides = array<i32>} : memref<32x32xf32, #tpu.memory_space<vmem>>, vector<32x32xf32>,
    return
  }
  func.func @transform_0(%arg0: i32) -> (i32, i32) {
    %c0_i32 = arith.constant 0 : i32
    %c0_i32_0 = arith.constant 0 : i32
    return %arg0, %c0_i32 : i32, i32
  }
  func.func @transform_1(%arg0: i32) -> (i32, i32) {
    %c0_i32 = arith.constant 0 : i32
    %c0_i32_0 = arith.constant 0 : i32
    %c0_i32_1 = arith.constant 0 : i32
    return %c0_i32, %c0_i32_0 : i32, i32
  }
  func.func @transform_2(%arg0: i32) -> (i32, i32) {
    %c0_i32 = arith.constant 0 : i32
    %c0_i32_0 = arith.constant 0 : i32
    %c0_i32_1 = arith.constant 0 : i32
    return %c0_i32, %c0_i32_0 : i32, i32
  }
  func.func @transform_3(%arg0: i32) -> (i32, i32) {
    %c0_i32 = arith.constant 0 : i32
    %c0_i32_0 = arith.constant 0 : i32
    %c0_i32_1 = arith.constant 0 : i32
    return %c0_i32, %c0_i32_0 : i32, i32
  }
  func.func @transform_4(%arg0: i32) -> (i32, i32) {
    %c0_i32 = arith.constant 0 : i32
    %c0_i32_0 = arith.constant 0 : i32
    %c0_i32_1 = arith.constant 0 : i32
    return %c0_i32, %c0_i32_0 : i32, i32
  }
  func.func @transform_5(%arg0: i32) -> (i32, i32) {
    %c0_i32 = arith.constant 0 : i32
    %c0_i32_0 = arith.constant 0 : i32
    return %arg0, %c0_i32 : i32, i32
  }
}

</mosaic_0001>

<llo_original>
// kernel: unit_vt_forward.1
$region0: #{unit_vt_forward.1}
  #allocation0 [shape = 'u32[]', space=smem, size = 0x4, offset = 0x4, fixed_abs, tag = 'smem constant byte address 0x4 - core index']
  #allocation1 [shape = 'u32[144,128]{1,0:T(1,128)}', space=vmem, size = 0x12000, scoped, tag = 'internal scratch']
  %s0 = inlined_call_operand.vmem [shape: f32[32,32], index: 0, kind: input, shape index: {}]
  %s1 = inlined_call_operand.vmem [shape: f32[288,32], index: 1, kind: input, shape index: {}]
  %s2 = inlined_call_operand.vmem [shape: f32[1,32], index: 2, kind: input, shape index: {}]
  %s3 = inlined_call_operand.vmem [shape: f32[32,32], index: 3, kind: input, shape index: {}]
  %s4 = inlined_call_operand.vmem [shape: f32[1,32], index: 4, kind: input, shape index: {}]
  %s5 = inlined_call_operand.vmem [shape: f32[32,32], index: 5, kind: output, shape index: {}]
  %s6 = sld [smem:[#allocation0]]
  $region30: #{unit_vt_forward.1} parent=0
    _
  %s8 = ssub.s32 1, %s6
  %s9 = scalar_select 0, %s8, %s6
  // Predicated region
  $region2: #{unit_vt_forward.1} parent=0 // pred_check
    _
  $region3: #{unit_vt_forward.1} parent=0 // pred_check_branch
    %11 = sbr.rel (0) target = $region5
  $region4: #{unit_vt_forward.1} parent=0 // pred_region
    _
  $region5: #{unit_vt_forward.1} parent=0 // pred_fallthru
    _
  // Predicated region
  $region6: #{unit_vt_forward.1} parent=0 // pred_check
    _
  $region7: #{unit_vt_forward.1} parent=0 // pred_check_branch
    %13 = sbr.rel (0) target = $region9
  $region8: #{unit_vt_forward.1} parent=0 // pred_region
    _
  $region9: #{unit_vt_forward.1} parent=0 // pred_fallthru
    _
  // Predicated region
  $region10: #{unit_vt_forward.1} parent=0 // pred_check
    _
  $region11: #{unit_vt_forward.1} parent=0 // pred_check_branch
    %15 = sbr.rel (0) target = $region13
  $region12: #{unit_vt_forward.1} parent=0 // pred_region
    _
  $region13: #{unit_vt_forward.1} parent=0 // pred_fallthru
    _
  // Predicated region
  $region14: #{unit_vt_forward.1} parent=0 // pred_check
    _
  $region15: #{unit_vt_forward.1} parent=0 // pred_check_branch
    %17 = sbr.rel (0) target = $region17
  $region16: #{unit_vt_forward.1} parent=0 // pred_region
    _
  $region17: #{unit_vt_forward.1} parent=0 // pred_fallthru
    _
  // Predicated region
  $region18: #{unit_vt_forward.1} parent=0 // pred_check
    _
  $region19: #{unit_vt_forward.1} parent=0 // pred_check_branch
    %19 = sbr.rel (0) target = $region21
  $region20: #{unit_vt_forward.1} parent=0 // pred_region
    _
  $region21: #{unit_vt_forward.1} parent=0 // pred_fallthru
    _
  %v20 = vld [vmem:[%s0] sm:$0xff]
  %v21 = vld [vmem:[%s0 + $0x8] sm:$0xff]
  %v22 = vld [vmem:[%s0 + $0x10] sm:$0xff]
  %v23 = vld [vmem:[%s0 + $0x18] sm:$0xff]
  %v24 = vlaneseq
  %v25 = vshrl.u32 %v24, 7
  %v26 = vadd.s32 %v25, 8
  %v27 = vadd.s32 %v25, 16
  %v28 = vadd.s32 %v25, 24
  %vm29 = vcmp.lt.s32.totalorder %v25, 0
  %v30 = vsub.s32 0, %v25
  %v31 = vsel %vm29, %v30, %v25
  %v32 = vshrl.u32 %v31, 4
  %v33 = vand.u32 %v31, 15
  %v34 = vsub.s32 0, %v33
  %v35 = vsel %vm29, %v34, %v33
  %vm36 = vcmp.lt.s32.totalorder %v26, 0
  %v37 = vsub.s32 0, %v26
  %v38 = vsel %vm36, %v37, %v26
  %v39 = vshrl.u32 %v38, 4
  %v40 = vand.u32 %v38, 15
  %v41 = vsub.s32 0, %v40
  %v42 = vsel %vm36, %v41, %v40
  %vm43 = vcmp.lt.s32.totalorder %v27, 0
  %v44 = vsub.s32 0, %v27
  %v45 = vsel %vm43, %v44, %v27
  %v46 = vshrl.u32 %v45, 4
  %v47 = vand.u32 %v45, 15
  %v48 = vsub.s32 0, %v47
  %v49 = vsel %vm43, %v48, %v47
  %vm50 = vcmp.lt.s32.totalorder %v28, 0
  %v51 = vsub.s32 0, %v28
  %v52 = vsel %vm50, %v51, %v28
  %v53 = vshrl.u32 %v52, 4
  %v54 = vand.u32 %v52, 15
  %v55 = vsub.s32 0, %v54
  %v56 = vsel %vm50, %v55, %v54
  %vm57 = vcmp.ne.s32.totalorder %v35, 0
  %vm58 = vcmp.ne.s32.totalorder %v42, 0
  %vm59 = vcmp.ne.s32.totalorder %v49, 0
  %vm60 = vcmp.ne.s32.totalorder %v56, 0
  %vm61 = vcmp.lt.s32.totalorder %v35, 0
  %vm62 = vcmp.lt.s32.totalorder %v42, 0
  %vm63 = vcmp.lt.s32.totalorder %v49, 0
  %vm64 = vcmp.lt.s32.totalorder %v56, 0
  %vm65 = vmand %vm61, %vm57
  %vm66 = vmand %vm62, %vm58
  %vm67 = vmand %vm63, %vm59
  %vm68 = vmand %vm64, %vm60
  %v69 = vadd.s32 %v35, 16
  %v70 = vadd.s32 %v42, 16
  %v71 = vadd.s32 %v49, 16
  %v72 = vadd.s32 %v56, 16
  %v73 = vsel %vm65, %v69, %v35
  %v74 = vsel %vm66, %v70, %v42
  %v75 = vsel %vm67, %v71, %v49
  %v76 = vsel %vm68, %v72, %v56
  %vm81 = vcmask 1043456
  %v82 = vrot.slane %v20, 4
  %v83 = vrot.slane %v21, 4
  %v84 = vsel %vm81, %v82, %v83
  %v85 = vrot.slane %v22, 4
  %v86 = vsel %vm81, %v83, %v85
  %v87 = vrot.slane %v23, 4
  %v88 = vsel %vm81, %v85, %v87
  %v93 = vsel %vm81, 0.0, %v82
  %v94 = vadd.s32 %v73, 4294967292
  %v95 = vadd.s32 %v74, 4294967292
  %v96 = vadd.s32 %v75, 4294967292
  %v97 = vadd.s32 %v76, 4294967292
  %vm98 = vcmp.ge.s32.totalorder %v94, 0
  %vm99 = vcmp.ge.s32.totalorder %v95, 0
  %vm100 = vcmp.ge.s32.totalorder %v96, 0
  %vm101 = vcmp.ge.s32.totalorder %v97, 0
  %vm102 = vcmp.lt.s32.totalorder %v94, 16
  %vm103 = vcmp.lt.s32.totalorder %v95, 16
  %vm104 = vcmp.lt.s32.totalorder %v96, 16
  %vm105 = vcmp.lt.s32.totalorder %v97, 16
  %vm106 = vmand %vm98, %vm102
  %vm107 = vmand %vm99, %vm103
  %vm108 = vmand %vm100, %vm104
  %vm109 = vmand %vm101, %vm105
  %v110 = vsel %vm106, 1, 0
  %v111 = vsel %vm107, 1, 0
  %v112 = vsel %vm108, 1, 0
  %v113 = vsel %vm109, 1, 0
  %vm114 = vcmp.eq.s32.totalorder %v110, 1
  %vm115 = vcmp.eq.s32.totalorder %v111, 1
  %vm116 = vcmp.eq.s32.totalorder %v112, 1
  %vm117 = vcmp.eq.s32.totalorder %v113, 1
  %v118 = vsel %vm114, %v93, 0.0
  %v119 = vsel %vm115, %v84, 0.0
  %v120 = vsel %vm116, %v86, 0.0
  %v121 = vsel %vm117, %v88, 0.0
  %vm122 = vcmask 1042432
  %v123 = vrot.slane %v20, 5
  %v124 = vrot.slane %v21, 5
  %v125 = vsel %vm122, %v123, %v124
  %v126 = vrot.slane %v22, 5
  %v127 = vsel %vm122, %v124, %v126
  %v128 = vrot.slane %v23, 5
  %v129 = vsel %vm122, %v126, %v128
  %v134 = vsel %vm122, 0.0, %v123
  %v135 = vadd.s32 %v73, 4294967293
  %v136 = vadd.s32 %v74, 4294967293
  %v137 = vadd.s32 %v75, 4294967293
  %v138 = vadd.s32 %v76, 4294967293
  %vm139 = vcmp.ge.s32.totalorder %v135, 0
  %vm140 = vcmp.ge.s32.totalorder %v136, 0
  %vm141 = vcmp.ge.s32.totalorder %v137, 0
  %vm142 = vcmp.ge.s32.totalorder %v138, 0
  %vm143 = vcmp.lt.s32.totalorder %v135, 16
  %vm144 = vcmp.lt.s32.totalorder %v136, 16
  %vm145 = vcmp.lt.s32.totalorder %v137, 16
  %vm146 = vcmp.lt.s32.totalorder %v138, 16
  %vm147 = vmand %vm139, %vm143
  %vm148 = vmand %vm140, %vm144
  %vm149 = vmand %vm141, %vm145
  %vm150 = vmand %vm142, %vm146
  %v151 = vsel %vm147, 1, 0
  %v152 = vsel %vm148, 1, 0
  %v153 = vsel %vm149, 1, 0
  %v154 = vsel %vm150, 1, 0
  %vm155 = vcmp.eq.s32.totalorder %v151, 1
  %vm156 = vcmp.eq.s32.totalorder %v152, 1
  %vm157 = vcmp.eq.s32.totalorder %v153, 1
  %vm158 = vcmp.eq.s32.totalorder %v154, 1
  %v159 = vsel %vm155, %v134, 0.0
  %v160 = vsel %vm156, %v125, 0.0
  %v161 = vsel %vm157, %v127, 0.0
  %v162 = vsel %vm158, %v129, 0.0
  %vm163 = vcmask 1041408
  %v164 = vrot.slane %v20, 6
  %v165 = vrot.slane %v21, 6
  %v166 = vsel %vm163, %v164, %v165
  %v167 = vrot.slane %v22, 6
  %v168 = vsel %vm163, %v165, %v167
  %v169 = vrot.slane %v23, 6
  %v170 = vsel %vm163, %v167, %v169
  %v175 = vsel %vm163, 0.0, %v164
  %v176 = vadd.s32 %v73, 4294967294
  %v177 = vadd.s32 %v74, 4294967294
  %v178 = vadd.s32 %v75, 4294967294
  %v179 = vadd.s32 %v76, 4294967294
  %vm180 = vcmp.ge.s32.totalorder %v176, 0
  %vm181 = vcmp.ge.s32.totalorder %v177, 0
  %vm182 = vcmp.ge.s32.totalorder %v178, 0
  %vm183 = vcmp.ge.s32.totalorder %v179, 0
  %vm184 = vcmp.lt.s32.totalorder %v176, 16
  %vm185 = vcmp.lt.s32.totalorder %v177, 16
  %vm186 = vcmp.lt.s32.totalorder %v178, 16
  %vm187 = vcmp.lt.s32.totalorder %v179, 16
  %vm188 = vmand %vm180, %vm184
  %vm189 = vmand %vm181, %vm185
  %vm190 = vmand %vm182, %vm186
  %vm191 = vmand %vm183, %vm187
  %v192 = vsel %vm188, 1, 0
  %v193 = vsel %vm189, 1, 0
  %v194 = vsel %vm190, 1, 0
  %v195 = vsel %vm191, 1, 0
  %vm196 = vcmp.eq.s32.totalorder %v192, 1
  %vm197 = vcmp.eq.s32.totalorder %v193, 1
  %vm198 = vcmp.eq.s32.totalorder %v194, 1
  %vm199 = vcmp.eq.s32.totalorder %v195, 1
  %v200 = vsel %vm196, %v175, 0.0
  %v201 = vsel %vm197, %v166, 0.0
  %v202 = vsel %vm198, %v168, 0.0
  %v203 = vsel %vm199, %v170, 0.0
  %vm204 = vcmask 1040384
  %v205 = vrot.slane %v20, 7
  %v206 = vrot.slane %v21, 7
  %v207 = vsel %vm204, %v205, %v206
  %v208 = vrot.slane %v22, 7
  %v209 = vsel %vm204, %v206, %v208
  %v210 = vrot.slane %v23, 7
  %v211 = vsel %vm204, %v208, %v210
  %v216 = vsel %vm204, 0.0, %v205
  %v217 = vadd.s32 %v73, 4294967295
  %v218 = vadd.s32 %v74, 4294967295
  %v219 = vadd.s32 %v75, 4294967295
  %v220 = vadd.s32 %v76, 4294967295
  %vm221 = vcmp.ge.s32.totalorder %v217, 0
  %vm222 = vcmp.ge.s32.totalorder %v218, 0
  %vm223 = vcmp.ge.s32.totalorder %v219, 0
  %vm224 = vcmp.ge.s32.totalorder %v220, 0
  %vm225 = vcmp.lt.s32.totalorder %v217, 16
  %vm226 = vcmp.lt.s32.totalorder %v218, 16
  %vm227 = vcmp.lt.s32.totalorder %v219, 16
  %vm228 = vcmp.lt.s32.totalorder %v220, 16
  %vm229 = vmand %vm221, %vm225
  %vm230 = vmand %vm222, %vm226
  %vm231 = vmand %vm223, %vm227
  %vm232 = vmand %vm224, %vm228
  %v233 = vsel %vm229, 1, 0
  %v234 = vsel %vm230, 1, 0
  %v235 = vsel %vm231, 1, 0
  %v236 = vsel %vm232, 1, 0
  %vm237 = vcmp.eq.s32.totalorder %v233, 1
  %vm238 = vcmp.eq.s32.totalorder %v234, 1
  %vm239 = vcmp.eq.s32.totalorder %v235, 1
  %vm240 = vcmp.eq.s32.totalorder %v236, 1
  %v241 = vsel %vm237, %v216, 0.0
  %v242 = vsel %vm238, %v207, 0.0
  %v243 = vsel %vm239, %v209, 0.0
  %v244 = vsel %vm240, %v211, 0.0
  %vm245 = vcmask 1046528
  %v246 = vrot.slane %v20, 1
  %v247 = vrot.slane %v21, 1
  %v248 = vsel %vm245, %v246, %v247
  %v249 = vrot.slane %v22, 1
  %v250 = vsel %vm245, %v247, %v249
  %v251 = vrot.slane %v23, 1
  %v252 = vsel %vm245, %v249, %v251
  %v257 = vsel %vm245, %v251, 0.0
  %v258 = vadd.s32 %v73, 1
  %v259 = vadd.s32 %v74, 1
  %v260 = vadd.s32 %v75, 1
  %v261 = vadd.s32 %v76, 1
  %vm262 = vcmp.ge.s32.totalorder %v258, 0
  %vm263 = vcmp.ge.s32.totalorder %v259, 0
  %vm264 = vcmp.ge.s32.totalorder %v260, 0
  %vm265 = vcmp.ge.s32.totalorder %v261, 0
  %vm266 = vcmp.lt.s32.totalorder %v258, 16
  %vm267 = vcmp.lt.s32.totalorder %v259, 16
  %vm268 = vcmp.lt.s32.totalorder %v260, 16
  %vm269 = vcmp.lt.s32.totalorder %v261, 16
  %vm270 = vmand %vm262, %vm266
  %vm271 = vmand %vm263, %vm267
  %vm272 = vmand %vm264, %vm268
  %vm273 = vmand %vm265, %vm269
  %v274 = vsel %vm270, 1, 0
  %v275 = vsel %vm271, 1, 0
  %v276 = vsel %vm272, 1, 0
  %v277 = vsel %vm273, 1, 0
  %vm278 = vcmp.eq.s32.totalorder %v274, 1
  %vm279 = vcmp.eq.s32.totalorder %v275, 1
  %vm280 = vcmp.eq.s32.totalorder %v276, 1
  %vm281 = vcmp.eq.s32.totalorder %v277, 1
  %v282 = vsel %vm278, %v248, 0.0
  %v283 = vsel %vm279, %v250, 0.0
  %v284 = vsel %vm280, %v252, 0.0
  %v285 = vsel %vm281, %v257, 0.0
  %vm286 = vcmask 1045504
  %v287 = vrot.slane %v20, 2
  %v288 = vrot.slane %v21, 2
  %v289 = vsel %vm286, %v287, %v288
  %v290 = vrot.slane %v22, 2
  %v291 = vsel %vm286, %v288, %v290
  %v292 = vrot.slane %v23, 2
  %v293 = vsel %vm286, %v290, %v292
  %v298 = vsel %vm286, %v292, 0.0
  %v299 = vadd.s32 %v73, 2
  %v300 = vadd.s32 %v74, 2
  %v301 = vadd.s32 %v75, 2
  %v302 = vadd.s32 %v76, 2
  %vm303 = vcmp.ge.s32.totalorder %v299, 0
  %vm304 = vcmp.ge.s32.totalorder %v300, 0
  %vm305 = vcmp.ge.s32.totalorder %v301, 0
  %vm306 = vcmp.ge.s32.totalorder %v302, 0
  %vm307 = vcmp.lt.s32.totalorder %v299, 16
  %vm308 = vcmp.lt.s32.totalorder %v300, 16
  %vm309 = vcmp.lt.s32.totalorder %v301, 16
  %vm310 = vcmp.lt.s32.totalorder %v302, 16
  %vm311 = vmand %vm303, %vm307
  %vm312 = vmand %vm304, %vm308
  %vm313 = vmand %vm305, %vm309
  %vm314 = vmand %vm306, %vm310
  %v315 = vsel %vm311, 1, 0
  %v316 = vsel %vm312, 1, 0
  %v317 = vsel %vm313, 1, 0
  %v318 = vsel %vm314, 1, 0
  %vm319 = vcmp.eq.s32.totalorder %v315, 1
  %vm320 = vcmp.eq.s32.totalorder %v316, 1
  %vm321 = vcmp.eq.s32.totalorder %v317, 1
  %vm322 = vcmp.eq.s32.totalorder %v318, 1
  %v323 = vsel %vm319, %v289, 0.0
  %v324 = vsel %vm320, %v291, 0.0
  %v325 = vsel %vm321, %v293, 0.0
  %v326 = vsel %vm322, %v298, 0.0
  %vm327 = vcmask 1044480
  %v328 = vrot.slane %v20, 3
  %v329 = vrot.slane %v21, 3
  %v330 = vsel %vm327, %v328, %v329
  %v331 = vrot.slane %v22, 3
  %v332 = vsel %vm327, %v329, %v331
  %v333 = vrot.slane %v23, 3
  %v334 = vsel %vm327, %v331, %v333
  %v339 = vsel %vm327, %v333, 0.0
  %v340 = vadd.s32 %v73, 3
  %v341 = vadd.s32 %v74, 3
  %v342 = vadd.s32 %v75, 3
  %v343 = vadd.s32 %v76, 3
  %vm344 = vcmp.ge.s32.totalorder %v340, 0
  %vm345 = vcmp.ge.s32.totalorder %v341, 0
  %vm346 = vcmp.ge.s32.totalorder %v342, 0
  %vm347 = vcmp.ge.s32.totalorder %v343, 0
  %vm348 = vcmp.lt.s32.totalorder %v340, 16
  %vm349 = vcmp.lt.s32.totalorder %v341, 16
  %vm350 = vcmp.lt.s32.totalorder %v342, 16
  %vm351 = vcmp.lt.s32.totalorder %v343, 16
  %vm352 = vmand %vm344, %vm348
  %vm353 = vmand %vm345, %vm349
  %vm354 = vmand %vm346, %vm350
  %vm355 = vmand %vm347, %vm351
  %v356 = vsel %vm352, 1, 0
  %v357 = vsel %vm353, 1, 0
  %v358 = vsel %vm354, 1, 0
  %v359 = vsel %vm355, 1, 0
  %vm360 = vcmp.eq.s32.totalorder %v356, 1
  %vm361 = vcmp.eq.s32.totalorder %v357, 1
  %vm362 = vcmp.eq.s32.totalorder %v358, 1
  %vm363 = vcmp.eq.s32.totalorder %v359, 1
  %v364 = vsel %vm360, %v330, 0.0
  %v365 = vsel %vm361, %v332, 0.0
  %v366 = vsel %vm362, %v334, 0.0
  %v367 = vsel %vm363, %v339, 0.0
  %v369 = vsel %vm81, %v87, 0.0
  %v370 = vadd.s32 %v73, 4
  %v371 = vadd.s32 %v74, 4
  %v372 = vadd.s32 %v75, 4
  %v373 = vadd.s32 %v76, 4
  %vm374 = vcmp.ge.s32.totalorder %v370, 0
  %vm375 = vcmp.ge.s32.totalorder %v371, 0
  %vm376 = vcmp.ge.s32.totalorder %v372, 0
  %vm377 = vcmp.ge.s32.totalorder %v373, 0
  %vm378 = vcmp.lt.s32.totalorder %v370, 16
  %vm379 = vcmp.lt.s32.totalorder %v371, 16
  %vm380 = vcmp.lt.s32.totalorder %v372, 16
  %vm381 = vcmp.lt.s32.totalorder %v373, 16
  %vm382 = vmand %vm374, %vm378
  %vm383 = vmand %vm375, %vm379
  %vm384 = vmand %vm376, %vm380
  %vm385 = vmand %vm377, %vm381
  %v386 = vsel %vm382, 1, 0
  %v387 = vsel %vm383, 1, 0
  %v388 = vsel %vm384, 1, 0
  %v389 = vsel %vm385, 1, 0
  %vm390 = vcmp.eq.s32.totalorder %v386, 1
  %vm391 = vcmp.eq.s32.totalorder %v387, 1
  %vm392 = vcmp.eq.s32.totalorder %v388, 1
  %vm393 = vcmp.eq.s32.totalorder %v389, 1
  %v394 = vsel %vm390, %v84, 0.0
  %v395 = vsel %vm391, %v86, 0.0
  %v396 = vsel %vm392, %v88, 0.0
  %v397 = vsel %vm393, %v369, 0.0
  %402 = vrot.lane.b32.xlu0 %v159, 32
  %v403 = vpop.permute.xlu0 %402
  %404 = vrot.lane.b32.xlu0 %v160, 32
  %v405 = vpop.permute.xlu0 %404
  %406 = vrot.lane.b32.xlu0 %v161, 32
  %v407 = vpop.permute.xlu0 %406
  %408 = vrot.lane.b32.xlu0 %v162, 32
  %v409 = vpop.permute.xlu0 %408
  %418 = vrot.lane.b32.xlu0 %v200, 64
  %v419 = vpop.permute.xlu0 %418
  %420 = vrot.lane.b32.xlu0 %v201, 64
  %v421 = vpop.permute.xlu0 %420
  %422 = vrot.lane.b32.xlu0 %v202, 64
  %v423 = vpop.permute.xlu0 %422
  %424 = vrot.lane.b32.xlu0 %v203, 64
  %v425 = vpop.permute.xlu0 %424
  %434 = vrot.lane.b32.xlu0 %v241, 96
  %v435 = vpop.permute.xlu0 %434
  %436 = vrot.lane.b32.xlu0 %v242, 96
  %v437 = vpop.permute.xlu0 %436
  %438 = vrot.lane.b32.xlu0 %v243, 96
  %v439 = vpop.permute.xlu0 %438
  %440 = vrot.lane.b32.xlu0 %v244, 96
  %v441 = vpop.permute.xlu0 %440
  %450 = vrot.lane.b32.xlu0 %v282, 32
  %v451 = vpop.permute.xlu0 %450
  %452 = vrot.lane.b32.xlu0 %v283, 32
  %v453 = vpop.permute.xlu0 %452
  %454 = vrot.lane.b32.xlu0 %v284, 32
  %v455 = vpop.permute.xlu0 %454
  %456 = vrot.lane.b32.xlu0 %v285, 32
  %v457 = vpop.permute.xlu0 %456
  %466 = vrot.lane.b32.xlu0 %v323, 64
  %v467 = vpop.permute.xlu0 %466
  %468 = vrot.lane.b32.xlu0 %v324, 64
  %v469 = vpop.permute.xlu0 %468
  %470 = vrot.lane.b32.xlu0 %v325, 64
  %v471 = vpop.permute.xlu0 %470
  %472 = vrot.lane.b32.xlu0 %v326, 64
  %v473 = vpop.permute.xlu0 %472
  %482 = vrot.lane.b32.xlu0 %v364, 96
  %v483 = vpop.permute.xlu0 %482
  %484 = vrot.lane.b32.xlu0 %v365, 96
  %v485 = vpop.permute.xlu0 %484
  %486 = vrot.lane.b32.xlu0 %v366, 96
  %v487 = vpop.permute.xlu0 %486
  %488 = vrot.lane.b32.xlu0 %v367, 96
  %v489 = vpop.permute.xlu0 %488
  %vm494 = vcmask 261120
  %v495 = vsel %vm494, %v118, %v403
  %v496 = vsel %vm494, %v119, %v405
  %v497 = vsel %vm494, %v120, %v407
  %v498 = vsel %vm494, %v121, %v409
  %vm499 = vcmask 523264
  %v500 = vsel %vm499, %v495, %v419
  %v501 = vsel %vm499, %v496, %v421
  %v502 = vsel %vm499, %v497, %v423
  %v503 = vsel %vm499, %v498, %v425
  %vm504 = vcmask 785408
  %v505 = vsel %vm504, %v500, %v435
  %v506 = vsel %vm504, %v501, %v437
  %v507 = vsel %vm504, %v502, %v439
  %v508 = vsel %vm504, %v503, %v441
  %v509 = vsel %vm494, %v20, %v451
  %v510 = vsel %vm494, %v21, %v453
  %v511 = vsel %vm494, %v22, %v455
  %v512 = vsel %vm494, %v23, %v457
  %v513 = vsel %vm499, %v509, %v467
  %v514 = vsel %vm499, %v510, %v469
  %v515 = vsel %vm499, %v511, %v471
  %v516 = vsel %vm499, %v512, %v473
  %v517 = vsel %vm504, %v513, %v483
  %v518 = vsel %vm504, %v514, %v485
  %v519 = vsel %vm504, %v515, %v487
  %v520 = vsel %vm504, %v516, %v489
  %v521 = vld [vmem:[%s1] sm:$0xff]
  %v522 = vld [vmem:[%s1 + $0x8] sm:$0xff]
  %v523 = vld [vmem:[%s1 + $0x10] sm:$0xff]
  %v524 = vld [vmem:[%s1 + $0x18] sm:$0xff]
  %v525 = vld [vmem:[%s1 + $0x20] sm:$0xff]
  %v526 = vld [vmem:[%s1 + $0x28] sm:$0xff]
  %v527 = vld [vmem:[%s1 + $0x30] sm:$0xff]
  %v528 = vld [vmem:[%s1 + $0x38] sm:$0xff]
  %v529 = vld [vmem:[%s1 + $0x40] sm:$0xff]
  %v530 = vld [vmem:[%s1 + $0x48] sm:$0xff]
  %v531 = vld [vmem:[%s1 + $0x50] sm:$0xff]
  %v532 = vld [vmem:[%s1 + $0x58] sm:$0xff]
  %v533 = vld [vmem:[%s1 + $0x60] sm:$0xff]
  %v534 = vld [vmem:[%s1 + $0x68] sm:$0xff]
  %v535 = vld [vmem:[%s1 + $0x70] sm:$0xff]
  %v536 = vld [vmem:[%s1 + $0x78] sm:$0xff]
  %v537 = vld [vmem:[%s1 + $0x80] sm:$0xff]
  %v538 = vld [vmem:[%s1 + $0x88] sm:$0xff]
  %v539 = vld [vmem:[%s1 + $0x90] sm:$0xff]
  %v540 = vld [vmem:[%s1 + $0x98] sm:$0xff]
  %v541 = vld [vmem:[%s1 + $0xa0] sm:$0xff]
  %v542 = vld [vmem:[%s1 + $0xa8] sm:$0xff]
  %v543 = vld [vmem:[%s1 + $0xb0] sm:$0xff]
  %v544 = vld [vmem:[%s1 + $0xb8] sm:$0xff]
  %v545 = vld [vmem:[%s1 + $0xc0] sm:$0xff]
  %v546 = vld [vmem:[%s1 + $0xc8] sm:$0xff]
  %v547 = vld [vmem:[%s1 + $0xd0] sm:$0xff]
  %v548 = vld [vmem:[%s1 + $0xd8] sm:$0xff]
  %v549 = vld [vmem:[%s1 + $0xe0] sm:$0xff]
  %v550 = vld [vmem:[%s1 + $0xe8] sm:$0xff]
  %v551 = vld [vmem:[%s1 + $0xf0] sm:$0xff]
  %v552 = vld [vmem:[%s1 + $0xf8] sm:$0xff]
  %v553 = vld [vmem:[%s1 + $0x100] sm:$0xff]
  %v554 = vld [vmem:[%s1 + $0x108] sm:$0xff]
  %v555 = vld [vmem:[%s1 + $0x110] sm:$0xff]
  %v556 = vld [vmem:[%s1 + $0x118] sm:$0xff]
  %v557 = vld [vmem:[%s2] sm:$0x1]
  %v559 = vlaneseq
  %v560 = vshrl.u32 %v559, 7
  %v561 = vsub.s32 0, %v560
  %v562 = vrot.slane %v557, %v561
  %v565 = vsel %vm494, %v394, 0
  %v568 = vsel %vm494, %v395, 0
  %v571 = vsel %vm494, %v396, 0
  %v574 = vsel %vm494, %v397, 0
  %576 = vmatprep.subr.mxu0 0.0
  %577 = vmatpush1.msra.mxu0 %v536
  %578 = vmatprep.subr.mxu0 0.0
  %579 = vmatpush1.msra.mxu0 %v535
  %580 = vmatprep.subr.mxu0 0.0
  %581 = vmatpush1.msra.mxu0 %v534
  %582 = vmatprep.subr.mxu0 0.0
  %583 = vmatpush1.msra.mxu0 %v533
  %584 = vmatprep.subr.mxu0 0.0
  %585 = vmatpush1.msra.mxu0 %v532
  %586 = vmatprep.subr.mxu0 0.0
  %587 = vmatpush1.msra.mxu0 %v531
  %588 = vmatprep.subr.mxu0 0.0
  %589 = vmatpush1.msra.mxu0 %v530
  %590 = vmatprep.subr.mxu0 0.0
  %591 = vmatpush1.msra.mxu0 %v529
  %592 = vmatprep.subr.mxu0 0.0
  %593 = vmatpush1.msra.mxu0 %v528
  %594 = vmatprep.subr.mxu0 0.0
  %595 = vmatpush1.msra.mxu0 %v527
  %596 = vmatprep.subr.mxu0 0.0
  %597 = vmatpush1.msra.mxu0 %v526
  %598 = vmatprep.subr.mxu0 0.0
  %599 = vmatpush1.msra.mxu0 %v525
  %600 = vmatprep.subr.mxu0 0.0
  %601 = vmatpush1.msra.mxu0 %v524
  %602 = vmatprep.subr.mxu0 0.0
  %603 = vmatpush1.msra.mxu0 %v523
  %604 = vmatprep.subr.mxu0 0.0
  %605 = vmatpush1.msra.mxu0 %v522
  %606 = vmatprep.subr.mxu0 0.0
  %607 = vmatpush1.msra.mxu0 %v521
  %608 = vmatprep.subr.mxu0 0.0
  %609 = vmatpush2.msra.mxu0 %v552
  %610 = vmatprep.subr.mxu0 0.0
  %611 = vmatpush2.msra.mxu0 %v551
  %612 = vmatprep.subr.mxu0 0.0
  %613 = vmatpush2.msra.mxu0 %v550
  %614 = vmatprep.subr.mxu0 0.0
  %615 = vmatpush2.msra.mxu0 %v549
  %616 = vmatprep.subr.mxu0 0.0
  %617 = vmatpush2.msra.mxu0 %v548
  %618 = vmatprep.subr.mxu0 0.0
  %619 = vmatpush2.msra.mxu0 %v547
  %620 = vmatprep.subr.mxu0 0.0
  %621 = vmatpush2.msra.mxu0 %v546
  %622 = vmatprep.subr.mxu0 0.0
  %623 = vmatpush2.msra.mxu0 %v545
  %624 = vmatprep.subr.mxu0 0.0
  %625 = vmatpush2.msra.mxu0 %v544
  %626 = vmatprep.subr.mxu0 0.0
  %627 = vmatpush2.msra.mxu0 %v543
  %628 = vmatprep.subr.mxu0 0.0
  %629 = vmatpush2.msra.mxu0 %v542
  %630 = vmatprep.subr.mxu0 0.0
  %631 = vmatpush2.msra.mxu0 %v541
  %632 = vmatprep.subr.mxu0 0.0
  %633 = vmatpush2.msra.mxu0 %v540
  %634 = vmatprep.subr.mxu0 0.0
  %635 = vmatpush2.msra.mxu0 %v539
  %636 = vmatprep.subr.mxu0 0.0
  %637 = vmatpush2.msra.mxu0 %v538
  %638 = vmatprep.subr.mxu0 0.0
  %639 = vmatpush2.msra.mxu0 %v537
  %640 = vmatprep.mubr.f32.mxu0 %v517
  %641 = vmatmul.mubr.f32.gmra.mxu0 %v505
  %v642 = vpop.f32.mrf.mxu0
  %v643 = vadd.f32 %v562, %v642
  %v644 = vpop.f32.mrf.mxu0
  %645 = vmatprep.mubr.f32.mxu0 %v518
  %646 = vmatmul.mubr.f32.gmra.mxu0 %v506
  %v647 = vpop.f32.mrf.mxu0
  %v648 = vadd.f32 %v562, %v647
  %v649 = vpop.f32.mrf.mxu0
  %650 = vmatprep.mubr.f32.mxu0 %v519
  %651 = vmatmul.mubr.f32.gmra.mxu0 %v507
  %v652 = vpop.f32.mrf.mxu0
  %v653 = vadd.f32 %v562, %v652
  %v654 = vpop.f32.mrf.mxu0
  %655 = vmatprep.mubr.f32.mxu0 %v520
  %656 = vmatmul.mubr.f32.gmra.mxu0 %v508
  %v657 = vpop.f32.mrf.mxu0
  %v658 = vadd.f32 %v562, %v657
  %v659 = vpop.f32.mrf.mxu0
  %660 = vdwg.mxu0
  %661 = vmatprep.subr.mxu0 0.0
  %662 = vmatpush1.msra.mxu0 0.0
  %663 = vmatprep.subr.mxu0 0.0
  %664 = vmatpush1.msra.mxu0 0.0
  %665 = vmatprep.subr.mxu0 0.0
  %666 = vmatpush1.msra.mxu0 0.0
  %667 = vmatprep.subr.mxu0 0.0
  %668 = vmatpush1.msra.mxu0 0.0
  %669 = vmatprep.subr.mxu0 0.0
  %670 = vmatpush1.msra.mxu0 0.0
  %671 = vmatprep.subr.mxu0 0.0
  %672 = vmatpush1.msra.mxu0 0.0
  %673 = vmatprep.subr.mxu0 0.0
  %674 = vmatpush1.msra.mxu0 0.0
  %675 = vmatprep.subr.mxu0 0.0
  %676 = vmatpush1.msra.mxu0 0.0
  %677 = vmatprep.subr.mxu0 0.0
  %678 = vmatpush1.msra.mxu0 0.0
  %679 = vmatprep.subr.mxu0 0.0
  %680 = vmatpush1.msra.mxu0 0.0
  %681 = vmatprep.subr.mxu0 0.0
  %682 = vmatpush1.msra.mxu0 0.0
  %683 = vmatprep.subr.mxu0 0.0
  %684 = vmatpush1.msra.mxu0 0.0
  %685 = vmatprep.subr.mxu0 0.0
  %686 = vmatpush1.msra.mxu0 %v556
  %687 = vmatprep.subr.mxu0 0.0
  %688 = vmatpush1.msra.mxu0 %v555
  %689 = vmatprep.subr.mxu0 0.0
  %690 = vmatpush1.msra.mxu0 %v554
  %691 = vmatprep.subr.mxu0 0.0
  %692 = vmatpush1.msra.mxu0 %v553
  %693 = vmatprep.subr.mxu0 0.0
  %694 = vmatpush2.msra.mxu0 0.0
  %695 = vmatprep.subr.mxu0 0.0
  %696 = vmatpush2.msra.mxu0 0.0
  %697 = vmatprep.subr.mxu0 0.0
  %698 = vmatpush2.msra.mxu0 0.0
  %699 = vmatprep.subr.mxu0 0.0
  %700 = vmatpush2.msra.mxu0 0.0
  %701 = vmatprep.subr.mxu0 0.0
  %702 = vmatpush2.msra.mxu0 0.0
  %703 = vmatprep.subr.mxu0 0.0
  %704 = vmatpush2.msra.mxu0 0.0
  %705 = vmatprep.subr.mxu0 0.0
  %706 = vmatpush2.msra.mxu0 0.0
  %707 = vmatprep.subr.mxu0 0.0
  %708 = vmatpush2.msra.mxu0 0.0
  %709 = vmatprep.subr.mxu0 0.0
  %710 = vmatpush2.msra.mxu0 0.0
  %711 = vmatprep.subr.mxu0 0.0
  %712 = vmatpush2.msra.mxu0 0.0
  %713 = vmatprep.subr.mxu0 0.0
  %714 = vmatpush2.msra.mxu0 0.0
  %715 = vmatprep.subr.mxu0 0.0
  %716 = vmatpush2.msra.mxu0 0.0
  %717 = vmatprep.subr.mxu0 0.0
  %718 = vmatpush2.msra.mxu0 0.0
  %719 = vmatprep.subr.mxu0 0.0
  %720 = vmatpush2.msra.mxu0 0.0
  %721 = vmatprep.subr.mxu0 0.0
  %722 = vmatpush2.msra.mxu0 0.0
  %723 = vmatprep.subr.mxu0 0.0
  %724 = vmatpush2.msra.mxu0 0.0
  %725 = vmatprep.mubr.f32.mxu0 0.0
  %726 = vmatmul.mubr.f32.gmra.mxu0 %v565
  %v727 = vpop.f32.mrf.mxu0
  %v728 = vadd.f32 %v643, %v727
  %v729 = vpop.f32.mrf.mxu0
  %730 = vmatprep.mubr.f32.mxu0 0.0
  %731 = vmatmul.mubr.f32.gmra.mxu0 %v568
  %v732 = vpop.f32.mrf.mxu0
  %v733 = vadd.f32 %v648, %v732
  %v734 = vpop.f32.mrf.mxu0
  %735 = vmatprep.mubr.f32.mxu0 0.0
  %736 = vmatmul.mubr.f32.gmra.mxu0 %v571
  %v737 = vpop.f32.mrf.mxu0
  %v738 = vadd.f32 %v653, %v737
  %v739 = vpop.f32.mrf.mxu0
  %740 = vmatprep.mubr.f32.mxu0 0.0
  %741 = vmatmul.mubr.f32.gmra.mxu0 %v574
  %v742 = vpop.f32.mrf.mxu0
  %v743 = vadd.f32 %v658, %v742
  %v744 = vpop.f32.mrf.mxu0
  %745 = vdwg.mxu0
  %v746 = vmul.f32 %v728, 0.5
  %v747 = vmul.f32 %v733, 0.5
  %v748 = vmul.f32 %v738, 0.5
  %v749 = vmul.f32 %v743, 0.5
  %v750 = vmul.f32 %v728, 0.70710677
  %v751 = vmul.f32 %v733, 0.70710677
  %v752 = vmul.f32 %v738, 0.70710677
  %v753 = vmul.f32 %v743, 0.70710677
  %v754 = verf.f32.pop %v750
  %v755 = verf.f32.pop %v751
  %v756 = verf.f32.pop %v752
  %v757 = verf.f32.pop %v753
  %v758 = vadd.f32 %v754, 1.0
  %v759 = vadd.f32 %v755, 1.0
  %v760 = vadd.f32 %v756, 1.0
  %v761 = vadd.f32 %v757, 1.0
  %v762 = vmul.f32 %v746, %v758
  %v763 = vmul.f32 %v747, %v759
  %v764 = vmul.f32 %v748, %v760
  %v765 = vmul.f32 %v749, %v761
  %v766 = vld [vmem:[%s3] sm:$0xff]
  %v767 = vld [vmem:[%s3 + $0x8] sm:$0xff]
  %v768 = vld [vmem:[%s3 + $0x10] sm:$0xff]
  %v769 = vld [vmem:[%s3 + $0x18] sm:$0xff]
  %v770 = vld [vmem:[%s4] sm:$0x1]
  %v772 = vlaneseq
  %v773 = vshrl.u32 %v772, 7
  %v774 = vsub.s32 0, %v773
  %v775 = vrot.slane %v770, %v774
  %v778 = vsel %vm494, %v762, 0
  %v781 = vsel %vm494, %v763, 0
  %v784 = vsel %vm494, %v764, 0
  %v787 = vsel %vm494, %v765, 0
  %789 = vmatprep.subr.mxu0 0.0
  %790 = vmatpush1.msra.mxu0 0.0
  %791 = vmatprep.subr.mxu0 0.0
  %792 = vmatpush1.msra.mxu0 0.0
  %793 = vmatprep.subr.mxu0 0.0
  %794 = vmatpush1.msra.mxu0 0.0
  %795 = vmatprep.subr.mxu0 0.0
  %796 = vmatpush1.msra.mxu0 0.0
  %797 = vmatprep.subr.mxu0 0.0
  %798 = vmatpush1.msra.mxu0 0.0
  %799 = vmatprep.subr.mxu0 0.0
  %800 = vmatpush1.msra.mxu0 0.0
  %801 = vmatprep.subr.mxu0 0.0
  %802 = vmatpush1.msra.mxu0 0.0
  %803 = vmatprep.subr.mxu0 0.0
  %804 = vmatpush1.msra.mxu0 0.0
  %805 = vmatprep.subr.mxu0 0.0
  %806 = vmatpush1.msra.mxu0 0.0
  %807 = vmatprep.subr.mxu0 0.0
  %808 = vmatpush1.msra.mxu0 0.0
  %809 = vmatprep.subr.mxu0 0.0
  %810 = vmatpush1.msra.mxu0 0.0
  %811 = vmatprep.subr.mxu0 0.0
  %812 = vmatpush1.msra.mxu0 0.0
  %813 = vmatprep.subr.mxu0 0.0
  %814 = vmatpush1.msra.mxu0 %v769
  %815 = vmatprep.subr.mxu0 0.0
  %816 = vmatpush1.msra.mxu0 %v768
  %817 = vmatprep.subr.mxu0 0.0
  %818 = vmatpush1.msra.mxu0 %v767
  %819 = vmatprep.subr.mxu0 0.0
  %820 = vmatpush1.msra.mxu0 %v766
  %821 = vmatprep.subr.mxu0 0.0
  %822 = vmatpush2.msra.mxu0 0.0
  %823 = vmatprep.subr.mxu0 0.0
  %824 = vmatpush2.msra.mxu0 0.0
  %825 = vmatprep.subr.mxu0 0.0
  %826 = vmatpush2.msra.mxu0 0.0
  %827 = vmatprep.subr.mxu0 0.0
  %828 = vmatpush2.msra.mxu0 0.0
  %829 = vmatprep.subr.mxu0 0.0
  %830 = vmatpush2.msra.mxu0 0.0
  %831 = vmatprep.subr.mxu0 0.0
  %832 = vmatpush2.msra.mxu0 0.0
  %833 = vmatprep.subr.mxu0 0.0
  %834 = vmatpush2.msra.mxu0 0.0
  %835 = vmatprep.subr.mxu0 0.0
  %836 = vmatpush2.msra.mxu0 0.0
  %837 = vmatprep.subr.mxu0 0.0
  %838 = vmatpush2.msra.mxu0 0.0
  %839 = vmatprep.subr.mxu0 0.0
  %840 = vmatpush2.msra.mxu0 0.0
  %841 = vmatprep.subr.mxu0 0.0
  %842 = vmatpush2.msra.mxu0 0.0
  %843 = vmatprep.subr.mxu0 0.0
  %844 = vmatpush2.msra.mxu0 0.0
  %845 = vmatprep.subr.mxu0 0.0
  %846 = vmatpush2.msra.mxu0 0.0
  %847 = vmatprep.subr.mxu0 0.0
  %848 = vmatpush2.msra.mxu0 0.0
  %849 = vmatprep.subr.mxu0 0.0
  %850 = vmatpush2.msra.mxu0 0.0
  %851 = vmatprep.subr.mxu0 0.0
  %852 = vmatpush2.msra.mxu0 0.0
  %853 = vmatprep.mubr.f32.mxu0 0.0
  %854 = vmatmul.mubr.f32.gmra.mxu0 %v778
  %v855 = vpop.f32.mrf.mxu0
  %v856 = vadd.f32 %v775, %v855
  %v857 = vpop.f32.mrf.mxu0
  %858 = vmatprep.mubr.f32.mxu0 0.0
  %859 = vmatmul.mubr.f32.gmra.mxu0 %v781
  %v860 = vpop.f32.mrf.mxu0
  %v861 = vadd.f32 %v775, %v860
  %v862 = vpop.f32.mrf.mxu0
  %863 = vmatprep.mubr.f32.mxu0 0.0
  %864 = vmatmul.mubr.f32.gmra.mxu0 %v784
  %v865 = vpop.f32.mrf.mxu0
  %v866 = vadd.f32 %v775, %v865
  %v867 = vpop.f32.mrf.mxu0
  %868 = vmatprep.mubr.f32.mxu0 0.0
  %869 = vmatmul.mubr.f32.gmra.mxu0 %v787
  %v870 = vpop.f32.mrf.mxu0
  %v871 = vadd.f32 %v775, %v870
  %v872 = vpop.f32.mrf.mxu0
  %873 = vdwg.mxu0
  %874 = vst.msk [vmem:[%s5] sm:$0xff] %vm494, %v856
  %875 = vst.msk [vmem:[%s5 + $0x8] sm:$0xff] %vm494, %v861
  %876 = vst.msk [vmem:[%s5 + $0x10] sm:$0xff] %vm494, %v866
  %877 = vst.msk [vmem:[%s5 + $0x18] sm:$0xff] %vm494, %v871
  // Predicated region
  $region22: #{unit_vt_forward.1} parent=0 // pred_check
    _
  $region23: #{unit_vt_forward.1} parent=0 // pred_check_branch
    %879 = sbr.rel (0) target = $region25
  $region24: #{unit_vt_forward.1} parent=0 // pred_region
    _
  $region25: #{unit_vt_forward.1} parent=0 // pred_fallthru
    _
  // Predicated region
  $region26: #{unit_vt_forward.1} parent=0 // pred_check
    _
  $region27: #{unit_vt_forward.1} parent=0 // pred_check_branch
    %881 = sbr.rel (0) target = $region29
  $region28: #{unit_vt_forward.1} parent=0 // pred_region
    _
  $region29: #{unit_vt_forward.1} parent=0 // pred_fallthru
    _

</llo_original>
